<compile_context>
chip_gen: v5e
topology: v5e:2x2
jax: 0.10.0
libtpu: 0.0.40
codegen_flags: <defaults>
</compile_context>

<pallas_src>
import functools

import jax
import jax.numpy as jnp
from jax.experimental import pallas as pl
from jax.experimental.pallas import tpu as pltpu

_KPAD = 128          # lane-padded width of the top-k outputs
_VMEM_LIMIT = 32 * 1024 * 1024   # explicit scoped-VMEM budget (safe on v5e/v6e/v7x)


def _round_up(x, m):
    return ((x + m - 1) // m) * m


def _pad_to(a, shape):
    pads = [(0, t - s) for s, t in zip(a.shape, shape)]
    if all(p == (0, 0) for p in pads):
        return a
    return jnp.pad(a, pads)


# --------------------------------------------------------------------------
# Kernel A: streamed score matmul + running top-k over tiled evidence axis
# --------------------------------------------------------------------------
def _score_topk_kernel(q_ref, emb_ref, kval_ref, kind_ref, *, k_total, e_blk,
                       e_total, kpad):
    e_step = pl.program_id(1)

    # init running top-k (output blocks are resident across the E axis)
    @pl.when(e_step == 0)
    def _init():
        kval_ref[...] = jnp.full(kval_ref.shape, -jnp.inf, jnp.float32)
        kind_ref[...] = jnp.zeros(kind_ref.shape, jnp.int32)

    q = q_ref[...]                     # [B_blk, D]   bf16
    e = emb_ref[...]                   # [e_blk, D]   bf16
    # score block = q @ e.T   (MXU, f32 accumulation)
    s = jax.lax.dot_general(q, e, (((1,), (1,)), ((), ())),
                            preferred_element_type=jnp.float32)   # [B_blk, e_blk]

    b_blk = s.shape[0]
    lane = jax.lax.broadcasted_iota(jnp.int32, (b_blk, e_blk), 1)
    gcol = lane + e_step * e_blk
    s = jnp.where(gcol < e_total, s, -jnp.inf)     # mask padded evidence rows

    # ---- per-block top-k (2 cross-lane reductions per rank, unrolled) ----
    bvals, bidxs = [], []
    cur = s
    for _ in range(k_total):
        m = jnp.max(cur, axis=-1, keepdims=True)                        # [B,1]
        loc = jnp.min(jnp.where(cur == m, lane, e_blk),
                      axis=-1, keepdims=True)                           # [B,1]
        bvals.append(m)
        bidxs.append(loc + e_step * e_blk)
        cur = jnp.where(lane == loc, -jnp.inf, cur)
    bval = jnp.concatenate(bvals, axis=-1)          # [B_blk, k_total]
    bidx = jnp.concatenate(bidxs, axis=-1)          # [B_blk, k_total]

    # ---- merge with running top-k (width 2*k_total: near free) ----
    run_v = kval_ref[...][:, :k_total]
    run_i = kind_ref[...][:, :k_total]
    cval = jnp.concatenate([run_v, bval], axis=-1)  # [B_blk, 2k]
    cidx = jnp.concatenate([run_i, bidx], axis=-1)
    w = 2 * k_total
    piota = jax.lax.broadcasted_iota(jnp.int32, (b_blk, w), 1)
    nvals, nidxs = [], []
    for _ in range(k_total):
        m = jnp.max(cval, axis=-1, keepdims=True)
        pos = jnp.min(jnp.where(cval == m, piota, w), axis=-1, keepdims=True)
        sel = piota == pos
        idx = jnp.max(jnp.where(sel, cidx, -1), axis=-1, keepdims=True)
        nvals.append(m)
        nidxs.append(idx)
        cval = jnp.where(sel, -jnp.inf, cval)
    new_val = jnp.concatenate(nvals, axis=-1)       # [B_blk, k_total], sorted desc
    new_idx = jnp.concatenate(nidxs, axis=-1)

    # lane-dense full-width stores back into the resident output blocks
    pad_w = kpad - k_total
    kval_ref[...] = jnp.concatenate(
        [new_val, jnp.full((b_blk, pad_w), -jnp.inf, jnp.float32)], axis=-1)
    kind_ref[...] = jnp.concatenate(
        [new_idx, jnp.zeros((b_blk, pad_w), jnp.int32)], axis=-1)


def score_topk(graph_feature, evidence_emb, k_total, *, e_blk=512):
    B, D = graph_feature.shape
    E = evidence_emb.shape[0]
    assert k_total <= _KPAD and k_total <= E

    # batch tiling (sublane-aligned; parallel axis for megacore)
    if B <= 128:
        b_pad = _round_up(B, 8)
        b_blk = b_pad
    else:
        b_blk = 128
        b_pad = _round_up(B, 128)

    # evidence tiling (lane-aligned; streamed/pipelined "arbitrary" axis)
    e_blk_eff = min(e_blk, _round_up(E, 128))
    assert e_blk_eff >= k_total
    e_pad = _round_up(E, e_blk_eff)

    q = _pad_to(graph_feature, (b_pad, D)).astype(jnp.bfloat16)
    emb = _pad_to(evidence_emb, (e_pad, D)).astype(jnp.bfloat16)

    grid = (b_pad // b_blk, e_pad // e_blk_eff)
    kernel = functools.partial(_score_topk_kernel, k_total=k_total,
                               e_blk=e_blk_eff, e_total=E, kpad=_KPAD)

    kval, kind = pl.pallas_call(
        kernel,
        out_shape=(
            jax.ShapeDtypeStruct((b_pad, _KPAD), jnp.float32),
            jax.ShapeDtypeStruct((b_pad, _KPAD), jnp.int32),
        ),
        grid_spec=pltpu.PrefetchScalarGridSpec(
            num_scalar_prefetch=0,
            grid=grid,
            in_specs=[
                pl.BlockSpec((b_blk, D), lambda b, e: (b, 0)),
                pl.BlockSpec((e_blk_eff, D), lambda b, e: (e, 0)),
            ],
            out_specs=(
                pl.BlockSpec((b_blk, _KPAD), lambda b, e: (b, 0)),
                pl.BlockSpec((b_blk, _KPAD), lambda b, e: (b, 0)),
            ),
        ),
        compiler_params=pltpu.CompilerParams(
            dimension_semantics=("parallel", "arbitrary"),
            vmem_limit_bytes=_VMEM_LIMIT,
        ),
    )(q, emb)
    return kval[:B, :k_total], kind[:B, :k_total]


# --------------------------------------------------------------------------
# Kernel B: DeepSet  (phi -> mean pool over k -> rho), fused, no pool matmul
# --------------------------------------------------------------------------
def _deepset_kernel(x_ref, w1_ref, b1_ref, w2_ref, b2_ref, o_ref, *, k):
    # x: [K, B_blk, I_pad] bf16, w1: [I_pad, H_pad] bf16, b1: [1, H_pad] f32,
    # w2: [H_pad, H_pad] bf16, b2: [1, H_pad] f32
    acc = None
    for j in range(k):                               # static unroll, K small
        hj = jnp.dot(x_ref[j], w1_ref[...],
                     preferred_element_type=jnp.float32)
        hj = jnp.maximum(hj + b1_ref[...], 0.0)      # phi, [B_blk, H_pad] f32
        acc = hj if acc is None else acc + hj
    pooled = acc * (1.0 / k)                         # mean over the set (VPU)
    out = jnp.dot(pooled.astype(w2_ref.dtype), w2_ref[...],
                  preferred_element_type=jnp.float32) + b2_ref[...]
    o_ref[...] = out                                 # rho, [B_blk, H_pad]


def deepset_apply(x_bki, w1, b1, w2, b2):
    # x_bki: [B, K, I] f32 (concatenated evidence + label embeddings)
    B, K, I = x_bki.shape
    H = w2.shape[1]
    i_pad = _round_up(I, 128)
    h_pad = _round_up(H, 128)
    if B <= 128:
        b_pad = _round_up(B, 8)
        b_blk = b_pad
    else:
        b_blk = 128
        b_pad = _round_up(B, 128)

    x = jnp.transpose(x_bki, (1, 0, 2))                       # [K, B, I]
    x = _pad_to(x, (K, b_pad, i_pad)).astype(jnp.bfloat16)
    w1p = _pad_to(w1, (i_pad, h_pad)).astype(jnp.bfloat16)
    w2p = _pad_to(w2, (h_pad, h_pad)).astype(jnp.bfloat16)
    b1p = _pad_to(b1.reshape(1, -1), (1, h_pad)).astype(jnp.float32)
    b2p = _pad_to(b2.reshape(1, -1), (1, h_pad)).astype(jnp.float32)

    grid = (b_pad // b_blk,)
    out = pl.pallas_call(
        functools.partial(_deepset_kernel, k=K),
        out_shape=jax.ShapeDtypeStruct((b_pad, h_pad), jnp.float32),
        grid_spec=pltpu.PrefetchScalarGridSpec(
            num_scalar_prefetch=0,
            grid=grid,
            in_specs=[
                pl.BlockSpec((K, b_blk, i_pad), lambda i: (0, i, 0)),
                pl.BlockSpec((i_pad, h_pad), lambda i: (0, 0)),
                pl.BlockSpec((1, h_pad), lambda i: (0, 0)),
                pl.BlockSpec((h_pad, h_pad), lambda i: (0, 0)),
                pl.BlockSpec((1, h_pad), lambda i: (0, 0)),
            ],
            out_specs=pl.BlockSpec((b_blk, h_pad), lambda i: (i, 0)),
        ),
        compiler_params=pltpu.CompilerParams(
            dimension_semantics=("parallel",),
            vmem_limit_bytes=_VMEM_LIMIT,
        ),
    )(x, w1p, b1p, w2p, b2p)
    return out[:B, :H]


# --------------------------------------------------------------------------
# Retriever forward (glue + kernels)
# --------------------------------------------------------------------------
def retriever_forward(params, emb_label, graph_feature, mode, target, k,
                      compute_hit_rates=False):
    B, D = graph_feature.shape
    L = emb_label.shape[0]

    if mode == "train":
        k_total = k + 1
    elif mode == "test":
        k_total = k
    else:
        raise NotImplementedError

    kvalue, kind = score_topk(graph_feature, params["evidence_emb"], k_total)
    if mode == "train":
        kind = kind[:, 1:]
        kvalue = kvalue[:, 1:]

    # hit-rate diagnostics (torch prints these; guarded so no dead work by default)
    hit_rates = None
    if compute_hit_rates and target is not None:
        hit_rates = []
        for i in range(L):
            klabel = emb_label[i][kind]                          # [B, k]
            hit = (target[:, None] == klabel).sum(-1) / k
            hit_rates.append(hit.mean())

    # embedding gathers (glue)
    # TODO(synk): could be fused into the DeepSet kernel via PrefetchScalarGridSpec
    #             (scalar-prefetch `kind` + pl.Element row gather) to avoid the HBM
    #             round trip of the concatenated [B, k, D*(L+1)] tensor.
    kevidence_emb = params["evidence_emb"][kind]                 # [B, k, D]
    label_embs = [
        params["label_embedding"][i][emb_label[i][kind]]         # [B, k, D]
        for i in range(L)
    ]
    inp = jnp.concatenate([kevidence_emb] + label_embs, axis=-1)  # [B, k, D*(L+1)]

    deepset_out = deepset_apply(
        inp, params["w1"], params["b1"], params["w2"], params["b2"]
    )                                                            # [B, D]

    out = jnp.concatenate([graph_feature, deepset_out], axis=-1)  # [B, 2*D]
    if compute_hit_rates:
        return out, hit_rates
    return out


# --------------------------------------------------------------------------
if __name__ == "__main__":
    B, D, E, L, K = 8, 32, 2048, 2, 4   # batch, dim, num_evidence, label types, topk

    key = jax.random.PRNGKey(0)
    keys = jax.random.split(key, 12)

    graph_feature = jax.random.normal(keys[0], (B, D), jnp.float32)
    evidence_emb = 0.1 * jax.random.normal(keys[1], (E, D), jnp.float32)

    emb_label = jnp.stack(
        [
            jax.random.randint(keys[2], (E,), 0, 6, dtype=jnp.int32),
            jax.random.randint(keys[3], (E,), 0, 3, dtype=jnp.int32),
        ],
        axis=0,
    )                                                            # [L, E]
    num_classes_per_label = [int(emb_label[i].max()) + 1 for i in range(L)]
    label_embedding = [
        0.1 * jax.random.normal(keys[4 + i], (num_classes_per_label[i], D),
                                jnp.float32)
        for i in range(L)
    ]

    # DeepSet params: input_dim = D * (L + 1), hidden_dim = D
    I = D * (L + 1)
    params = {
        "evidence_emb": evidence_emb,
        "label_embedding": label_embedding,
        "w1": jax.random.normal(keys[7], (I, D), jnp.float32) / jnp.sqrt(I),
        "b1": jnp.zeros((D,), jnp.float32),
        "w2": jax.random.normal(keys[8], (D, D), jnp.float32) / jnp.sqrt(D),
        "b2": jnp.zeros((D,), jnp.float32),
    }

    target = jax.random.randint(keys[9], (B,), 0, 6, dtype=jnp.int32)

    out = retriever_forward(params, emb_label, graph_feature, "train", target, K)
    out = jax.block_until_ready(out)
    assert out.shape == (B, 2 * D), out.shape
    assert out.dtype == jnp.float32
    print("KERNEL_OK")
</pallas_src>

<mosaic_0001>
module attributes {stable_mosaic.version = 11 : i64} {
  func.func @_score_topk_kernel(%arg0: i32, %arg1: i32, %arg2: memref<8x32xbf16, #tpu.memory_space<vmem>>, %arg3: memref<512x32xbf16, #tpu.memory_space<vmem>>, %arg4: memref<8x128xf32, #tpu.memory_space<vmem>>, %arg5: memref<8x128xi32, #tpu.memory_space<vmem>>) attributes {dimension_semantics = [#tpu.dimension_semantics<parallel>, #tpu.dimension_semantics<arbitrary>], iteration_bounds = array<i64: 1, 4>, scalar_prefetch = 0 : i64, scratch_operands = 0 : i64, tpu.core_type = #tpu.core_type<tc>, window_params = [{transform_indices = @transform_0, window_bounds = array<i64: 8, 32>}, {transform_indices = @transform_1, window_bounds = array<i64: 512, 32>}, {transform_indices = @transform_2, window_bounds = array<i64: 8, 128>}, {transform_indices = @transform_3, window_bounds = array<i64: 8, 128>}]} {
    %c0_i32 = arith.constant 0 : i32
    %0 = arith.cmpi eq, %arg1, %c0_i32 : i32
    %1 = arith.extui %0 : i1 to i32
    %c0_i32_0 = arith.constant 0 : i32
    %2 = arith.cmpi ne, %1, %c0_i32_0 : i32
    scf.if %2 {
      %cst_66 = arith.constant 0xFF800000 : f32
      %180 = vector.broadcast %cst_66 : f32 to vector<8x128xf32>
      %c0_67 = arith.constant 0 : index
      %c0_68 = arith.constant 0 : index
      %181 = vector.load %arg4[%c0_67, %c0_68] : memref<8x128xf32, #tpu.memory_space<vmem>>, vector<8x128xf32>
      tpu.vector_store %arg4[%c0_67, %c0_68], %180 {strides = array<i32>} : memref<8x128xf32, #tpu.memory_space<vmem>>, vector<8x128xf32>,
      %c0_i32_69 = arith.constant 0 : i32
      %182 = vector.broadcast %c0_i32_69 : i32 to vector<8x128xi32>
      %c0_70 = arith.constant 0 : index
      %c0_71 = arith.constant 0 : index
      %183 = vector.load %arg5[%c0_70, %c0_71] : memref<8x128xi32, #tpu.memory_space<vmem>>, vector<8x128xi32>
      tpu.vector_store %arg5[%c0_70, %c0_71], %182 {strides = array<i32>} : memref<8x128xi32, #tpu.memory_space<vmem>>, vector<8x128xi32>,
    } else {
    }
    %c0 = arith.constant 0 : index
    %c0_1 = arith.constant 0 : index
    %3 = vector.load %arg2[%c0, %c0_1] : memref<8x32xbf16, #tpu.memory_space<vmem>>, vector<8x32xbf16>
    %c0_2 = arith.constant 0 : index
    %c0_3 = arith.constant 0 : index
    %4 = vector.load %arg3[%c0_2, %c0_3] : memref<512x32xbf16, #tpu.memory_space<vmem>>, vector<512x32xbf16>
    %cst = arith.constant dense<0.000000e+00> : vector<8x512xf32>
    %5 = tpu.matmul %3, %4, %cst {dimension_numbers = #tpu.dot_dimension_numbers<[1], [1], [0], [0], [0, 0, 1, 0], [], []>} : vector<8x32xbf16>, vector<512x32xbf16>, vector<8x512xf32> -> vector<8x512xf32>
    %6 = tpu.iota {dimensions = array<i32: 1>} : vector<8x512xi32>
    %c512_i32 = arith.constant 512 : i32
    %7 = arith.muli %arg1, %c512_i32 : i32
    %8 = vector.broadcast %7 : i32 to vector<8x512xi32>
    %9 = arith.addi %6, %8 : vector<8x512xi32>
    %c2048_i32 = arith.constant 2048 : i32
    %10 = vector.broadcast %c2048_i32 : i32 to vector<8x512xi32>
    %11 = arith.cmpi slt, %9, %10 : vector<8x512xi32>
    %cst_4 = arith.constant 0xFF800000 : f32
    %12 = vector.broadcast %cst_4 : f32 to vector<8x512xf32>
    %13 = arith.select %11, %5, %12 : vector<8x512xi1>, vector<8x512xf32>
    %cst_5 = arith.constant dense<0xFF800000> : vector<8xf32>
    %14 = vector.multi_reduction <maximumf>, %13, %cst_5 [1] : vector<8x512xf32> to vector<8xf32>
    %15 = vector.shape_cast %14 : vector<8xf32> to vector<8x1xf32>
    %16 = vector.broadcast %15 : vector<8x1xf32> to vector<8x512xf32>
    %17 = arith.cmpf oeq, %13, %16 : vector<8x512xf32>
    %c512_i32_6 = arith.constant 512 : i32
    %18 = vector.broadcast %c512_i32_6 : i32 to vector<8x512xi32>
    %19 = arith.select %17, %6, %18 : vector<8x512xi1>, vector<8x512xi32>
    %cst_7 = arith.constant dense<2147483647> : vector<8xi32>
    %20 = vector.multi_reduction <minsi>, %19, %cst_7 [1] : vector<8x512xi32> to vector<8xi32>
    %21 = vector.shape_cast %20 : vector<8xi32> to vector<8x1xi32>
    %c512_i32_8 = arith.constant 512 : i32
    %22 = arith.muli %arg1, %c512_i32_8 : i32
    %23 = vector.broadcast %22 : i32 to vector<8x1xi32>
    %24 = arith.addi %21, %23 : vector<8x1xi32>
    %25 = vector.broadcast %21 : vector<8x1xi32> to vector<8x512xi32>
    %26 = arith.cmpi eq, %6, %25 : vector<8x512xi32>
    %cst_9 = arith.constant 0xFF800000 : f32
    %27 = vector.broadcast %cst_9 : f32 to vector<8x512xf32>
    %28 = arith.select %26, %27, %13 : vector<8x512xi1>, vector<8x512xf32>
    %cst_10 = arith.constant dense<0xFF800000> : vector<8xf32>
    %29 = vector.multi_reduction <maximumf>, %28, %cst_10 [1] : vector<8x512xf32> to vector<8xf32>
    %30 = vector.shape_cast %29 : vector<8xf32> to vector<8x1xf32>
    %31 = vector.broadcast %30 : vector<8x1xf32> to vector<8x512xf32>
    %32 = arith.cmpf oeq, %28, %31 : vector<8x512xf32>
    %c512_i32_11 = arith.constant 512 : i32
    %33 = vector.broadcast %c512_i32_11 : i32 to vector<8x512xi32>
    %34 = arith.select %32, %6, %33 : vector<8x512xi1>, vector<8x512xi32>
    %cst_12 = arith.constant dense<2147483647> : vector<8xi32>
    %35 = vector.multi_reduction <minsi>, %34, %cst_12 [1] : vector<8x512xi32> to vector<8xi32>
    %36 = vector.shape_cast %35 : vector<8xi32> to vector<8x1xi32>
    %c512_i32_13 = arith.constant 512 : i32
    %37 = arith.muli %arg1, %c512_i32_13 : i32
    %38 = vector.broadcast %37 : i32 to vector<8x1xi32>
    %39 = arith.addi %36, %38 : vector<8x1xi32>
    %40 = vector.broadcast %36 : vector<8x1xi32> to vector<8x512xi32>
    %41 = arith.cmpi eq, %6, %40 : vector<8x512xi32>
    %cst_14 = arith.constant 0xFF800000 : f32
    %42 = vector.broadcast %cst_14 : f32 to vector<8x512xf32>
    %43 = arith.select %41, %42, %28 : vector<8x512xi1>, vector<8x512xf32>
    %cst_15 = arith.constant dense<0xFF800000> : vector<8xf32>
    %44 = vector.multi_reduction <maximumf>, %43, %cst_15 [1] : vector<8x512xf32> to vector<8xf32>
    %45 = vector.shape_cast %44 : vector<8xf32> to vector<8x1xf32>
    %46 = vector.broadcast %45 : vector<8x1xf32> to vector<8x512xf32>
    %47 = arith.cmpf oeq, %43, %46 : vector<8x512xf32>
    %c512_i32_16 = arith.constant 512 : i32
    %48 = vector.broadcast %c512_i32_16 : i32 to vector<8x512xi32>
    %49 = arith.select %47, %6, %48 : vector<8x512xi1>, vector<8x512xi32>
    %cst_17 = arith.constant dense<2147483647> : vector<8xi32>
    %50 = vector.multi_reduction <minsi>, %49, %cst_17 [1] : vector<8x512xi32> to vector<8xi32>
    %51 = vector.shape_cast %50 : vector<8xi32> to vector<8x1xi32>
    %c512_i32_18 = arith.constant 512 : i32
    %52 = arith.muli %arg1, %c512_i32_18 : i32
    %53 = vector.broadcast %52 : i32 to vector<8x1xi32>
    %54 = arith.addi %51, %53 : vector<8x1xi32>
    %55 = vector.broadcast %51 : vector<8x1xi32> to vector<8x512xi32>
    %56 = arith.cmpi eq, %6, %55 : vector<8x512xi32>
    %cst_19 = arith.constant 0xFF800000 : f32
    %57 = vector.broadcast %cst_19 : f32 to vector<8x512xf32>
    %58 = arith.select %56, %57, %43 : vector<8x512xi1>, vector<8x512xf32>
    %cst_20 = arith.constant dense<0xFF800000> : vector<8xf32>
    %59 = vector.multi_reduction <maximumf>, %58, %cst_20 [1] : vector<8x512xf32> to vector<8xf32>
    %60 = vector.shape_cast %59 : vector<8xf32> to vector<8x1xf32>
    %61 = vector.broadcast %60 : vector<8x1xf32> to vector<8x512xf32>
    %62 = arith.cmpf oeq, %58, %61 : vector<8x512xf32>
    %c512_i32_21 = arith.constant 512 : i32
    %63 = vector.broadcast %c512_i32_21 : i32 to vector<8x512xi32>
    %64 = arith.select %62, %6, %63 : vector<8x512xi1>, vector<8x512xi32>
    %cst_22 = arith.constant dense<2147483647> : vector<8xi32>
    %65 = vector.multi_reduction <minsi>, %64, %cst_22 [1] : vector<8x512xi32> to vector<8xi32>
    %66 = vector.shape_cast %65 : vector<8xi32> to vector<8x1xi32>
    %c512_i32_23 = arith.constant 512 : i32
    %67 = arith.muli %arg1, %c512_i32_23 : i32
    %68 = vector.broadcast %67 : i32 to vector<8x1xi32>
    %69 = arith.addi %66, %68 : vector<8x1xi32>
    %70 = vector.broadcast %66 : vector<8x1xi32> to vector<8x512xi32>
    %71 = arith.cmpi eq, %6, %70 : vector<8x512xi32>
    %cst_24 = arith.constant 0xFF800000 : f32
    %72 = vector.broadcast %cst_24 : f32 to vector<8x512xf32>
    %73 = arith.select %71, %72, %58 : vector<8x512xi1>, vector<8x512xf32>
    %cst_25 = arith.constant dense<0xFF800000> : vector<8xf32>
    %74 = vector.multi_reduction <maximumf>, %73, %cst_25 [1] : vector<8x512xf32> to vector<8xf32>
    %75 = vector.shape_cast %74 : vector<8xf32> to vector<8x1xf32>
    %76 = vector.broadcast %75 : vector<8x1xf32> to vector<8x512xf32>
    %77 = arith.cmpf oeq, %73, %76 : vector<8x512xf32>
    %c512_i32_26 = arith.constant 512 : i32
    %78 = vector.broadcast %c512_i32_26 : i32 to vector<8x512xi32>
    %79 = arith.select %77, %6, %78 : vector<8x512xi1>, vector<8x512xi32>
    %cst_27 = arith.constant dense<2147483647> : vector<8xi32>
    %80 = vector.multi_reduction <minsi>, %79, %cst_27 [1] : vector<8x512xi32> to vector<8xi32>
    %81 = vector.shape_cast %80 : vector<8xi32> to vector<8x1xi32>
    %c512_i32_28 = arith.constant 512 : i32
    %82 = arith.muli %arg1, %c512_i32_28 : i32
    %83 = vector.broadcast %82 : i32 to vector<8x1xi32>
    %84 = arith.addi %81, %83 : vector<8x1xi32>
    %85 = tpu.concatenate %15, %30, %45, %60, %75 in 1 : vector<8x1xf32>, vector<8x1xf32>, vector<8x1xf32>, vector<8x1xf32>, vector<8x1xf32> -> vector<8x5xf32>
    %86 = tpu.concatenate %24, %39, %54, %69, %84 in 1 : vector<8x1xi32>, vector<8x1xi32>, vector<8x1xi32>, vector<8x1xi32>, vector<8x1xi32> -> vector<8x5xi32>
    %c0_29 = arith.constant 0 : index
    %c0_30 = arith.constant 0 : index
    %87 = vector.load %arg4[%c0_29, %c0_30] : memref<8x128xf32, #tpu.memory_space<vmem>>, vector<8x128xf32>
    %88 = vector.extract_strided_slice %87 {offsets = [0, 0], sizes = [8, 5], strides = [1, 1]} : vector<8x128xf32> to vector<8x5xf32>
    %c0_31 = arith.constant 0 : index
    %c0_32 = arith.constant 0 : index
    %89 = vector.load %arg5[%c0_31, %c0_32] : memref<8x128xi32, #tpu.memory_space<vmem>>, vector<8x128xi32>
    %90 = vector.extract_strided_slice %89 {offsets = [0, 0], sizes = [8, 5], strides = [1, 1]} : vector<8x128xi32> to vector<8x5xi32>
    %91 = tpu.concatenate %88, %85 in 1 : vector<8x5xf32>, vector<8x5xf32> -> vector<8x10xf32>
    %92 = tpu.concatenate %90, %86 in 1 : vector<8x5xi32>, vector<8x5xi32> -> vector<8x10xi32>
    %93 = tpu.iota {dimensions = array<i32: 1>} : vector<8x10xi32>
    %cst_33 = arith.constant dense<0xFF800000> : vector<8xf32>
    %94 = vector.multi_reduction <maximumf>, %91, %cst_33 [1] : vector<8x10xf32> to vector<8xf32>
    %95 = vector.shape_cast %94 : vector<8xf32> to vector<8x1xf32>
    %96 = vector.broadcast %95 : vector<8x1xf32> to vector<8x10xf32>
    %97 = arith.cmpf oeq, %91, %96 : vector<8x10xf32>
    %c10_i32 = arith.constant 10 : i32
    %98 = vector.broadcast %c10_i32 : i32 to vector<8x10xi32>
    %99 = arith.select %97, %93, %98 : vector<8x10xi1>, vector<8x10xi32>
    %cst_34 = arith.constant dense<2147483647> : vector<8xi32>
    %100 = vector.multi_reduction <minsi>, %99, %cst_34 [1] : vector<8x10xi32> to vector<8xi32>
    %101 = vector.shape_cast %100 : vector<8xi32> to vector<8x1xi32>
    %102 = vector.broadcast %101 : vector<8x1xi32> to vector<8x10xi32>
    %103 = arith.cmpi eq, %93, %102 : vector<8x10xi32>
    %c-1_i32 = arith.constant -1 : i32
    %104 = vector.broadcast %c-1_i32 : i32 to vector<8x10xi32>
    %105 = arith.select %103, %92, %104 : vector<8x10xi1>, vector<8x10xi32>
    %cst_35 = arith.constant dense<-2147483648> : vector<8xi32>
    %106 = vector.multi_reduction <maxsi>, %105, %cst_35 [1] : vector<8x10xi32> to vector<8xi32>
    %107 = vector.shape_cast %106 : vector<8xi32> to vector<8x1xi32>
    %cst_36 = arith.constant 0xFF800000 : f32
    %108 = vector.broadcast %cst_36 : f32 to vector<8x10xf32>
    %109 = arith.select %103, %108, %91 : vector<8x10xi1>, vector<8x10xf32>
    %cst_37 = arith.constant dense<0xFF800000> : vector<8xf32>
    %110 = vector.multi_reduction <maximumf>, %109, %cst_37 [1] : vector<8x10xf32> to vector<8xf32>
    %111 = vector.shape_cast %110 : vector<8xf32> to vector<8x1xf32>
    %112 = vector.broadcast %111 : vector<8x1xf32> to vector<8x10xf32>
    %113 = arith.cmpf oeq, %109, %112 : vector<8x10xf32>
    %c10_i32_38 = arith.constant 10 : i32
    %114 = vector.broadcast %c10_i32_38 : i32 to vector<8x10xi32>
    %115 = arith.select %113, %93, %114 : vector<8x10xi1>, vector<8x10xi32>
    %cst_39 = arith.constant dense<2147483647> : vector<8xi32>
    %116 = vector.multi_reduction <minsi>, %115, %cst_39 [1] : vector<8x10xi32> to vector<8xi32>
    %117 = vector.shape_cast %116 : vector<8xi32> to vector<8x1xi32>
    %118 = vector.broadcast %117 : vector<8x1xi32> to vector<8x10xi32>
    %119 = arith.cmpi eq, %93, %118 : vector<8x10xi32>
    %c-1_i32_40 = arith.constant -1 : i32
    %120 = vector.broadcast %c-1_i32_40 : i32 to vector<8x10xi32>
    %121 = arith.select %119, %92, %120 : vector<8x10xi1>, vector<8x10xi32>
    %cst_41 = arith.constant dense<-2147483648> : vector<8xi32>
    %122 = vector.multi_reduction <maxsi>, %121, %cst_41 [1] : vector<8x10xi32> to vector<8xi32>
    %123 = vector.shape_cast %122 : vector<8xi32> to vector<8x1xi32>
    %cst_42 = arith.constant 0xFF800000 : f32
    %124 = vector.broadcast %cst_42 : f32 to vector<8x10xf32>
    %125 = arith.select %119, %124, %109 : vector<8x10xi1>, vector<8x10xf32>
    %cst_43 = arith.constant dense<0xFF800000> : vector<8xf32>
    %126 = vector.multi_reduction <maximumf>, %125, %cst_43 [1] : vector<8x10xf32> to vector<8xf32>
    %127 = vector.shape_cast %126 : vector<8xf32> to vector<8x1xf32>
    %128 = vector.broadcast %127 : vector<8x1xf32> to vector<8x10xf32>
    %129 = arith.cmpf oeq, %125, %128 : vector<8x10xf32>
    %c10_i32_44 = arith.constant 10 : i32
    %130 = vector.broadcast %c10_i32_44 : i32 to vector<8x10xi32>
    %131 = arith.select %129, %93, %130 : vector<8x10xi1>, vector<8x10xi32>
    %cst_45 = arith.constant dense<2147483647> : vector<8xi32>
    %132 = vector.multi_reduction <minsi>, %131, %cst_45 [1] : vector<8x10xi32> to vector<8xi32>
    %133 = vector.shape_cast %132 : vector<8xi32> to vector<8x1xi32>
    %134 = vector.broadcast %133 : vector<8x1xi32> to vector<8x10xi32>
    %135 = arith.cmpi eq, %93, %134 : vector<8x10xi32>
    %c-1_i32_46 = arith.constant -1 : i32
    %136 = vector.broadcast %c-1_i32_46 : i32 to vector<8x10xi32>
    %137 = arith.select %135, %92, %136 : vector<8x10xi1>, vector<8x10xi32>
    %cst_47 = arith.constant dense<-2147483648> : vector<8xi32>
    %138 = vector.multi_reduction <maxsi>, %137, %cst_47 [1] : vector<8x10xi32> to vector<8xi32>
    %139 = vector.shape_cast %138 : vector<8xi32> to vector<8x1xi32>
    %cst_48 = arith.constant 0xFF800000 : f32
    %140 = vector.broadcast %cst_48 : f32 to vector<8x10xf32>
    %141 = arith.select %135, %140, %125 : vector<8x10xi1>, vector<8x10xf32>
    %cst_49 = arith.constant dense<0xFF800000> : vector<8xf32>
    %142 = vector.multi_reduction <maximumf>, %141, %cst_49 [1] : vector<8x10xf32> to vector<8xf32>
    %143 = vector.shape_cast %142 : vector<8xf32> to vector<8x1xf32>
    %144 = vector.broadcast %143 : vector<8x1xf32> to vector<8x10xf32>
    %145 = arith.cmpf oeq, %141, %144 : vector<8x10xf32>
    %c10_i32_50 = arith.constant 10 : i32
    %146 = vector.broadcast %c10_i32_50 : i32 to vector<8x10xi32>
    %147 = arith.select %145, %93, %146 : vector<8x10xi1>, vector<8x10xi32>
    %cst_51 = arith.constant dense<2147483647> : vector<8xi32>
    %148 = vector.multi_reduction <minsi>, %147, %cst_51 [1] : vector<8x10xi32> to vector<8xi32>
    %149 = vector.shape_cast %148 : vector<8xi32> to vector<8x1xi32>
    %150 = vector.broadcast %149 : vector<8x1xi32> to vector<8x10xi32>
    %151 = arith.cmpi eq, %93, %150 : vector<8x10xi32>
    %c-1_i32_52 = arith.constant -1 : i32
    %152 = vector.broadcast %c-1_i32_52 : i32 to vector<8x10xi32>
    %153 = arith.select %151, %92, %152 : vector<8x10xi1>, vector<8x10xi32>
    %cst_53 = arith.constant dense<-2147483648> : vector<8xi32>
    %154 = vector.multi_reduction <maxsi>, %153, %cst_53 [1] : vector<8x10xi32> to vector<8xi32>
    %155 = vector.shape_cast %154 : vector<8xi32> to vector<8x1xi32>
    %cst_54 = arith.constant 0xFF800000 : f32
    %156 = vector.broadcast %cst_54 : f32 to vector<8x10xf32>
    %157 = arith.select %151, %156, %141 : vector<8x10xi1>, vector<8x10xf32>
    %cst_55 = arith.constant dense<0xFF800000> : vector<8xf32>
    %158 = vector.multi_reduction <maximumf>, %157, %cst_55 [1] : vector<8x10xf32> to vector<8xf32>
    %159 = vector.shape_cast %158 : vector<8xf32> to vector<8x1xf32>
    %160 = vector.broadcast %159 : vector<8x1xf32> to vector<8x10xf32>
    %161 = arith.cmpf oeq, %157, %160 : vector<8x10xf32>
    %c10_i32_56 = arith.constant 10 : i32
    %162 = vector.broadcast %c10_i32_56 : i32 to vector<8x10xi32>
    %163 = arith.select %161, %93, %162 : vector<8x10xi1>, vector<8x10xi32>
    %cst_57 = arith.constant dense<2147483647> : vector<8xi32>
    %164 = vector.multi_reduction <minsi>, %163, %cst_57 [1] : vector<8x10xi32> to vector<8xi32>
    %165 = vector.shape_cast %164 : vector<8xi32> to vector<8x1xi32>
    %166 = vector.broadcast %165 : vector<8x1xi32> to vector<8x10xi32>
    %167 = arith.cmpi eq, %93, %166 : vector<8x10xi32>
    %c-1_i32_58 = arith.constant -1 : i32
    %168 = vector.broadcast %c-1_i32_58 : i32 to vector<8x10xi32>
    %169 = arith.select %167, %92, %168 : vector<8x10xi1>, vector<8x10xi32>
    %cst_59 = arith.constant dense<-2147483648> : vector<8xi32>
    %170 = vector.multi_reduction <maxsi>, %169, %cst_59 [1] : vector<8x10xi32> to vector<8xi32>
    %171 = vector.shape_cast %170 : vector<8xi32> to vector<8x1xi32>
    %172 = tpu.concatenate %95, %111, %127, %143, %159 in 1 : vector<8x1xf32>, vector<8x1xf32>, vector<8x1xf32>, vector<8x1xf32>, vector<8x1xf32> -> vector<8x5xf32>
    %173 = tpu.concatenate %107, %123, %139, %155, %171 in 1 : vector<8x1xi32>, vector<8x1xi32>, vector<8x1xi32>, vector<8x1xi32>, vector<8x1xi32> -> vector<8x5xi32>
    %cst_60 = arith.constant 0xFF800000 : f32
    %174 = vector.broadcast %cst_60 : f32 to vector<8x123xf32>
    %175 = tpu.concatenate %172, %174 in 1 : vector<8x5xf32>, vector<8x123xf32> -> vector<8x128xf32>
    %c0_61 = arith.constant 0 : index
    %c0_62 = arith.constant 0 : index
    %176 = vector.load %arg4[%c0_61, %c0_62] : memref<8x128xf32, #tpu.memory_space<vmem>>, vector<8x128xf32>
    tpu.vector_store %arg4[%c0_61, %c0_62], %175 {strides = array<i32>} : memref<8x128xf32, #tpu.memory_space<vmem>>, vector<8x128xf32>,
    %c0_i32_63 = arith.constant 0 : i32
    %177 = vector.broadcast %c0_i32_63 : i32 to vector<8x123xi32>
    %178 = tpu.concatenate %173, %177 in 1 : vector<8x5xi32>, vector<8x123xi32> -> vector<8x128xi32>
    %c0_64 = arith.constant 0 : index
    %c0_65 = arith.constant 0 : index
    %179 = vector.load %arg5[%c0_64, %c0_65] : memref<8x128xi32, #tpu.memory_space<vmem>>, vector<8x128xi32>
    tpu.vector_store %arg5[%c0_64, %c0_65], %178 {strides = array<i32>} : memref<8x128xi32, #tpu.memory_space<vmem>>, vector<8x128xi32>,
    return
  }
  func.func @transform_0(%arg0: i32, %arg1: i32) -> (i32, i32) {
    %c0_i32 = arith.constant 0 : i32
    %c0_i32_0 = arith.constant 0 : i32
    return %arg0, %c0_i32 : i32, i32
  }
  func.func @transform_1(%arg0: i32, %arg1: i32) -> (i32, i32) {
    %c0_i32 = arith.constant 0 : i32
    %c0_i32_0 = arith.constant 0 : i32
    return %arg1, %c0_i32 : i32, i32
  }
  func.func @transform_2(%arg0: i32, %arg1: i32) -> (i32, i32) {
    %c0_i32 = arith.constant 0 : i32
    %c0_i32_0 = arith.constant 0 : i32
    return %arg0, %c0_i32 : i32, i32
  }
  func.func @transform_3(%arg0: i32, %arg1: i32) -> (i32, i32) {
    %c0_i32 = arith.constant 0 : i32
    %c0_i32_0 = arith.constant 0 : i32
    return %arg0, %c0_i32 : i32, i32
  }
}

</mosaic_0001>

<llo_original>
// kernel: tpu_custom_call.1
$region0: #{tpu_custom_call.1}
  #allocation0 [shape = 'u32[]', space=smem, size = 0x4, offset = 0x4, fixed_abs, tag = 'smem constant byte address 0x4 - core index']
  #allocation1 [shape = 'u32[72,128]{1,0:T(1,128)}', space=vmem, size = 0x9000, scoped, tag = 'internal scratch']
  %s0 = inlined_call_operand.vmem [shape: bf16[8,32], index: 0, kind: input, shape index: {}]
  %s1 = inlined_call_operand.vmem [shape: bf16[2048,32], index: 1, kind: input, shape index: {}]
  %s2 = inlined_call_operand.hbm [shape: f32[8,128], index: 2, kind: output, shape index: {0}]
  %s3 = inlined_call_operand.hbm [shape: s32[8,128], index: 3, kind: output, shape index: {1}]
  %4 = xla_tuple %s2, %s3
  %s5 = sld [smem:[#allocation0]]
  $region53: #{tpu_custom_call.1} parent=0
    _
  %s7 = ssub.s32 1, %s5
  %s8 = scalar_select 0, %s7, %s5
  $region1: #{tpu_custom_call.1} parent=0
    #allocation2 [shape = 'u8[4096]{0}', space=vmem, size = 0x1000, scoped, tag = 'output window, operand 0, single buffered']
    #allocation3 [shape = 's32[2]{0}', space=sflag, size = 0x8, scoped, tag = 'scoped memory for tpu_custom_call.1']
    #allocation4 [shape = 'u8[4096]{0}', space=vmem, size = 0x1000, scoped, tag = 'output window, operand 1, single buffered']
    #allocation5 [shape = 's32[1]{0}', space=sflag, size = 0x4, scoped, tag = 'scoped memory for tpu_custom_call.1']
    %9 = vsyncpa [#allocation3], 0
    %10 = vsyncpa [#allocation5], 0
    loop: start=0, step=1, limit=6
    $region2: #{tpu_custom_call.1} parent=1 // loop_pre_header
      _
    $region3: #{tpu_custom_call.1} parent=1 // loop_header
      %s12 = sphi 0, %s16
      %p13 = scmp.ge.s32.totalorder %s12, 6
      %s19 = sphi 0, %s31
      %s20 = sphi 0, %s27
      %s21 = sphi 0, %s19
      %s22 = sphi 0, %s20
      %s23 = sphi 0, %s21
      %s24 = sphi 0, %s22
      %s34 = sphi 0, %s36
      %s37 = sphi 0, %s34
      %s38 = sphi 0, %s37
      %s54 = sphi 0, %s38
      %s60 = sphi 0, %s62
      %s63 = sphi 0, %s60
      %s64 = sphi 0, %s63
      %s80 = sphi 0, %s64
      %s86 = sphi 0, %s88
      %s89 = sphi 0, %s86
      %s90 = sphi 0, %s89
      %s106 = sphi 0, %s90
      %s112 = sphi 0, %s114
      %s115 = sphi 0, %s112
      %s116 = sphi 0, %s115
      %s132 = sphi 0, %s116
    $region4: #{tpu_custom_call.1} parent=1 // loop_header_branch
      %15 = sbr.rel (%p13) target = $region8
    $region5: #{tpu_custom_call.1} parent=1 // loop_body
      %s17 = ssub.s32 %s12, 1
      %s18 = ssub.s32 %s12, 2
      %s25 = sadd.s32 1, %s20
      %p26 = scmp.ge.s32.totalorder %s25, 4
      %s27 = scalar_select %p26, 0, %s25
      %s28 = sadd.s32 1, %s19
      %s29 = scalar_select %p26, %s28, %s19
      %p30 = scmp.ge.s32.totalorder %s29, 1
      %s31 = scalar_select %p30, 0, %s29
      %s32 = ssub.s32 %s19, %s31
      %p33 = scmp.eq.s32.totalorder %s32, 0
      %s35 = sadd.s32 %s34, 1
      %s36 = scalar_select %p33, %s34, %s35
      %p39 = pneg %p33
      %p40 = scmp.eq.s32.totalorder %s12, 3
      %p41 = por %p39, %p40
      %p42 = scmp.ne.s32.totalorder %s34, %s37
      %p43 = scmp.eq.s32.totalorder %s12, 0
      %p44 = por %p42, %p43
      %p45 = scmp.ne.s32.totalorder %s34, %s37
      %p46 = scmp.eq.s32.totalorder %s17, 3
      %p47 = por %p45, %p46
      %p48 = scmp.ne.s32.totalorder %s37, %s38
      %p49 = scmp.eq.s32.totalorder %s17, 0
      %p50 = por %p48, %p49
      %p51 = scmp.ne.s32.totalorder %s37, %s38
      %p52 = scmp.eq.s32.totalorder %s18, 3
      %p53 = por %p51, %p52
      %p55 = scmp.ne.s32.totalorder %s38, %s54
      %p56 = scmp.eq.s32.totalorder %s18, 0
      %p57 = por %p55, %p56
      %s58 = ssub.s32 %s20, %s27
      %p59 = scmp.eq.s32.totalorder %s58, 0
      %s61 = sadd.s32 %s60, 1
      %s62 = scalar_select %p59, %s60, %s61
      %p65 = pneg %p59
      %p66 = scmp.eq.s32.totalorder %s12, 3
      %p67 = por %p65, %p66
      %p68 = scmp.ne.s32.totalorder %s60, %s63
      %p69 = scmp.eq.s32.totalorder %s12, 0
      %p70 = por %p68, %p69
      %p71 = scmp.ne.s32.totalorder %s60, %s63
      %p72 = scmp.eq.s32.totalorder %s17, 3
      %p73 = por %p71, %p72
      %p74 = scmp.ne.s32.totalorder %s63, %s64
      %p75 = scmp.eq.s32.totalorder %s17, 0
      %p76 = por %p74, %p75
      %p77 = scmp.ne.s32.totalorder %s63, %s64
      %p78 = scmp.eq.s32.totalorder %s18, 3
      %p79 = por %p77, %p78
      %p81 = scmp.ne.s32.totalorder %s64, %s80
      %p82 = scmp.eq.s32.totalorder %s18, 0
      %p83 = por %p81, %p82
      %s84 = ssub.s32 %s19, %s31
      %p85 = scmp.eq.s32.totalorder %s84, 0
      %s87 = sadd.s32 %s86, 1
      %s88 = scalar_select %p85, %s86, %s87
      %p91 = pneg %p85
      %p92 = scmp.eq.s32.totalorder %s12, 3
      %p93 = por %p91, %p92
      %p94 = scmp.ne.s32.totalorder %s86, %s89
      %p95 = scmp.eq.s32.totalorder %s12, 0
      %p96 = por %p94, %p95
      %p97 = scmp.ne.s32.totalorder %s86, %s89
      %p98 = scmp.eq.s32.totalorder %s17, 3
      %p99 = por %p97, %p98
      %p100 = scmp.ne.s32.totalorder %s89, %s90
      %p101 = scmp.eq.s32.totalorder %s17, 0
      %p102 = por %p100, %p101
      %p103 = scmp.ne.s32.totalorder %s89, %s90
      %p104 = scmp.eq.s32.totalorder %s18, 3
      %p105 = por %p103, %p104
      %p107 = scmp.ne.s32.totalorder %s90, %s106
      %p108 = scmp.eq.s32.totalorder %s18, 0
      %p109 = por %p107, %p108
      %s110 = ssub.s32 %s19, %s31
      %p111 = scmp.eq.s32.totalorder %s110, 0
      %s113 = sadd.s32 %s112, 1
      %s114 = scalar_select %p111, %s112, %s113
      %p117 = pneg %p111
      %p118 = scmp.eq.s32.totalorder %s12, 3
      %p119 = por %p117, %p118
      %p120 = scmp.ne.s32.totalorder %s112, %s115
      %p121 = scmp.eq.s32.totalorder %s12, 0
      %p122 = por %p120, %p121
      %p123 = scmp.ne.s32.totalorder %s112, %s115
      %p124 = scmp.eq.s32.totalorder %s17, 3
      %p125 = por %p123, %p124
      %p126 = scmp.ne.s32.totalorder %s115, %s116
      %p127 = scmp.eq.s32.totalorder %s17, 0
      %p128 = por %p126, %p127
      %p129 = scmp.ne.s32.totalorder %s115, %s116
      %p130 = scmp.eq.s32.totalorder %s18, 3
      %p131 = por %p129, %p130
      %p133 = scmp.ne.s32.totalorder %s116, %s132
      %p134 = scmp.eq.s32.totalorder %s18, 0
      %p135 = por %p133, %p134
      %p136 = scmp.le.s32.totalorder 1, %s12
      %p137 = scmp.lt.s32.totalorder %s12, 5
      %p138 = pnand %p136, %p137
      %p139 = pneg %p138
      // Predicated region
      $region9: #{tpu_custom_call.1} parent=5 // pred_check
        _
      $region10: #{tpu_custom_call.1} parent=5 // pred_check_branch
        %141 = sbr.rel (%p138) target = $region12
      $region11: #{tpu_custom_call.1} parent=5 // pred_region
        %s142 = ssub.s32 %s12, 1
        // Predicated region
        $region13: #{tpu_custom_call.1} parent=11 // pred_check
          %p143 = pneg %p50
        $region14: #{tpu_custom_call.1} parent=11 // pred_check_branch
          %145 = sbr.rel (%p143) target = $region16
        $region15: #{tpu_custom_call.1} parent=11 // pred_region
          %p146 = scmp.lt.s32.totalorder %s21, 0
          %s147 = scalar_select %p146, %s21, 0
          %s148 = smul.addr %s147, 4
          %s149 = scalar_lea.vmem %s0, %s148
        $region16: #{tpu_custom_call.1} parent=11 // pred_fallthru
          _
      $region12: #{tpu_custom_call.1} parent=5 // pred_fallthru
        _
      %p150 = scmp.lt.s32.totalorder %s12, 4
      // Predicated region
      $region17: #{tpu_custom_call.1} parent=5 // pred_check
        %p151 = pneg %p150
      $region18: #{tpu_custom_call.1} parent=5 // pred_check_branch
        %153 = sbr.rel (%p151) target = $region20
      $region19: #{tpu_custom_call.1} parent=5 // pred_region
        // Predicated region
        $region21: #{tpu_custom_call.1} parent=19 // pred_check
          %p154 = pneg %p70
        $region22: #{tpu_custom_call.1} parent=19 // pred_check_branch
          %156 = sbr.rel (%p154) target = $region24
        $region23: #{tpu_custom_call.1} parent=19 // pred_region
          %s157 = smul.u32 64, %s20
          %p158 = scmp.lt.s32.totalorder %s157, 255
          %s159 = scalar_select %p158, %s157, 255
          %s160 = smul.addr %s159, 4
          %s161 = scalar_lea.vmem %s1, %s160
          %s162 = smul.u32 64, %s20
        $region24: #{tpu_custom_call.1} parent=19 // pred_fallthru
          _
      $region20: #{tpu_custom_call.1} parent=5 // pred_fallthru
        _
      %p163 = scmp.le.s32.totalorder 1, %s12
      %p164 = scmp.lt.s32.totalorder %s12, 5
      %p165 = pnand %p163, %p164
      %p166 = pneg %p165
      // Predicated region
      $region25: #{tpu_custom_call.1} parent=5 // pred_check
        _
      $region26: #{tpu_custom_call.1} parent=5 // pred_check_branch
        %168 = sbr.rel (%p165) target = $region28
      $region27: #{tpu_custom_call.1} parent=5 // pred_region
        %s169 = ssub.s32 %s12, 1
        %p170 = scmp.lt.s32.totalorder %s21, 0
        %s171 = scalar_select %p170, %s21, 0
        %s172 = smul.addr %s171, 4
        %s173 = scalar_lea.vmem %s0, %s172
        %p174 = pneg %p50
        %p175 = pneg %p47
        %s176 = smul.u32 64, %s22
        %p177 = scmp.lt.s32.totalorder %s176, 255
        %s178 = scalar_select %p177, %s176, 255
        %s179 = smul.addr %s178, 4
        %s180 = scalar_lea.vmem %s1, %s179
        %p181 = pneg %p76
        %p182 = pneg %p73
        %p183 = pneg %p102
        %p184 = pneg %p99
        %p185 = pneg %p128
        %p186 = pneg %p125
        %p187 = scmp.lt.s32.totalorder %s21, 0
        %s188 = scalar_select %p187, %s21, 0
        %s189 = smul.addr %s188, 4
        %s190 = scalar_lea.vmem %s0, %s189
        %s191 = smul.u32 64, %s22
        %p192 = scmp.lt.s32.totalorder %s191, 255
        %s193 = scalar_select %p192, %s191, 255
        %s194 = smul.addr %s193, 4
        %s195 = scalar_lea.vmem %s1, %s194
        %s196 = smul.u32 64, %s22
        %p197 = scmp.eq.s32.totalorder %s22, 0
        // Predicated region
        $region29: #{tpu_custom_call.1} parent=27 // pred_check
          %p198 = pneg %p197
        $region30: #{tpu_custom_call.1} parent=27 // pred_check_branch
          %200 = sbr.rel (%p198) target = $region32
        $region31: #{tpu_custom_call.1} parent=27 // pred_region
          %201 = vst [vmem:[#allocation2] sm:$0xff] -inf
          %202 = vst [vmem:[#allocation4] sm:$0xff] 0
        $region32: #{tpu_custom_call.1} parent=27 // pred_fallthru
          _
        %v203 = vld [vmem:[%s190] sm:$0xf]
        %v204 = vld [vmem:[%s195] sm:$0xf]
        %v205 = vld [vmem:[%s195 + $0x4] sm:$0xf]
        %v206 = vld [vmem:[%s195 + $0x8] sm:$0xf]
        %v207 = vld [vmem:[%s195 + $0xc] sm:$0xf]
        %v208 = vld [vmem:[%s195 + $0x10] sm:$0xf]
        %v209 = vld [vmem:[%s195 + $0x14] sm:$0xf]
        %v210 = vld [vmem:[%s195 + $0x18] sm:$0xf]
        %v211 = vld [vmem:[%s195 + $0x1c] sm:$0xf]
        %v212 = vld [vmem:[%s195 + $0x20] sm:$0xf]
        %v213 = vld [vmem:[%s195 + $0x24] sm:$0xf]
        %v214 = vld [vmem:[%s195 + $0x28] sm:$0xf]
        %v215 = vld [vmem:[%s195 + $0x2c] sm:$0xf]
        %v216 = vld [vmem:[%s195 + $0x30] sm:$0xf]
        %v217 = vld [vmem:[%s195 + $0x34] sm:$0xf]
        %v218 = vld [vmem:[%s195 + $0x38] sm:$0xf]
        %v219 = vld [vmem:[%s195 + $0x3c] sm:$0xf]
        %v220 = vld [vmem:[%s195 + $0x40] sm:$0xf]
        %v221 = vld [vmem:[%s195 + $0x44] sm:$0xf]
        %v222 = vld [vmem:[%s195 + $0x48] sm:$0xf]
        %v223 = vld [vmem:[%s195 + $0x4c] sm:$0xf]
        %v224 = vld [vmem:[%s195 + $0x50] sm:$0xf]
        %v225 = vld [vmem:[%s195 + $0x54] sm:$0xf]
        %v226 = vld [vmem:[%s195 + $0x58] sm:$0xf]
        %v227 = vld [vmem:[%s195 + $0x5c] sm:$0xf]
        %v228 = vld [vmem:[%s195 + $0x60] sm:$0xf]
        %v229 = vld [vmem:[%s195 + $0x64] sm:$0xf]
        %v230 = vld [vmem:[%s195 + $0x68] sm:$0xf]
        %v231 = vld [vmem:[%s195 + $0x6c] sm:$0xf]
        %v232 = vld [vmem:[%s195 + $0x70] sm:$0xf]
        %v233 = vld [vmem:[%s195 + $0x74] sm:$0xf]
        %v234 = vld [vmem:[%s195 + $0x78] sm:$0xf]
        %v235 = vld [vmem:[%s195 + $0x7c] sm:$0xf]
        %v236 = vld [vmem:[%s195 + $0x80] sm:$0xf]
        %v237 = vld [vmem:[%s195 + $0x84] sm:$0xf]
        %v238 = vld [vmem:[%s195 + $0x88] sm:$0xf]
        %v239 = vld [vmem:[%s195 + $0x8c] sm:$0xf]
        %v240 = vld [vmem:[%s195 + $0x90] sm:$0xf]
        %v241 = vld [vmem:[%s195 + $0x94] sm:$0xf]
        %v242 = vld [vmem:[%s195 + $0x98] sm:$0xf]
        %v243 = vld [vmem:[%s195 + $0x9c] sm:$0xf]
        %v244 = vld [vmem:[%s195 + $0xa0] sm:$0xf]
        %v245 = vld [vmem:[%s195 + $0xa4] sm:$0xf]
        %v246 = vld [vmem:[%s195 + $0xa8] sm:$0xf]
        %v247 = vld [vmem:[%s195 + $0xac] sm:$0xf]
        %v248 = vld [vmem:[%s195 + $0xb0] sm:$0xf]
        %v249 = vld [vmem:[%s195 + $0xb4] sm:$0xf]
        %v250 = vld [vmem:[%s195 + $0xb8] sm:$0xf]
        %v251 = vld [vmem:[%s195 + $0xbc] sm:$0xf]
        %v252 = vld [vmem:[%s195 + $0xc0] sm:$0xf]
        %v253 = vld [vmem:[%s195 + $0xc4] sm:$0xf]
        %v254 = vld [vmem:[%s195 + $0xc8] sm:$0xf]
        %v255 = vld [vmem:[%s195 + $0xcc] sm:$0xf]
        %v256 = vld [vmem:[%s195 + $0xd0] sm:$0xf]
        %v257 = vld [vmem:[%s195 + $0xd4] sm:$0xf]
        %v258 = vld [vmem:[%s195 + $0xd8] sm:$0xf]
        %v259 = vld [vmem:[%s195 + $0xdc] sm:$0xf]
        %v260 = vld [vmem:[%s195 + $0xe0] sm:$0xf]
        %v261 = vld [vmem:[%s195 + $0xe4] sm:$0xf]
        %v262 = vld [vmem:[%s195 + $0xe8] sm:$0xf]
        %v263 = vld [vmem:[%s195 + $0xec] sm:$0xf]
        %v264 = vld [vmem:[%s195 + $0xf0] sm:$0xf]
        %v265 = vld [vmem:[%s195 + $0xf4] sm:$0xf]
        %v266 = vld [vmem:[%s195 + $0xf8] sm:$0xf]
        %v267 = vld [vmem:[%s195 + $0xfc] sm:$0xf]
        %v332 = vunpack.c.l.b16 %v204
        %v333 = vunpack.c.l.b16 %v205
        %v334 = vunpack.c.l.b16 %v206
        %v335 = vunpack.c.l.b16 %v207
        %v336 = vunpack.c.l.b16 %v208
        %v337 = vunpack.c.l.b16 %v209
        %v338 = vunpack.c.l.b16 %v210
        %v339 = vunpack.c.l.b16 %v211
        %v340 = vunpack.c.l.b16 %v212
        %v341 = vunpack.c.l.b16 %v213
        %v342 = vunpack.c.l.b16 %v214
        %v343 = vunpack.c.l.b16 %v215
        %v344 = vunpack.c.l.b16 %v216
        %v345 = vunpack.c.l.b16 %v217
        %v346 = vunpack.c.l.b16 %v218
        %v347 = vunpack.c.l.b16 %v219
        %v348 = vunpack.c.l.b16 %v220
        %v349 = vunpack.c.l.b16 %v221
        %v350 = vunpack.c.l.b16 %v222
        %v351 = vunpack.c.l.b16 %v223
        %v352 = vunpack.c.l.b16 %v224
        %v353 = vunpack.c.l.b16 %v225
        %v354 = vunpack.c.l.b16 %v226
        %v355 = vunpack.c.l.b16 %v227
        %v356 = vunpack.c.l.b16 %v228
        %v357 = vunpack.c.l.b16 %v229
        %v358 = vunpack.c.l.b16 %v230
        %v359 = vunpack.c.l.b16 %v231
        %v360 = vunpack.c.l.b16 %v232
        %v361 = vunpack.c.l.b16 %v233
        %v362 = vunpack.c.l.b16 %v234
        %v363 = vunpack.c.l.b16 %v235
        %v364 = vunpack.c.l.b16 %v236
        %v365 = vunpack.c.l.b16 %v237
        %v366 = vunpack.c.l.b16 %v238
        %v367 = vunpack.c.l.b16 %v239
        %v368 = vunpack.c.l.b16 %v240
        %v369 = vunpack.c.l.b16 %v241
        %v370 = vunpack.c.l.b16 %v242
        %v371 = vunpack.c.l.b16 %v243
        %v372 = vunpack.c.l.b16 %v244
        %v373 = vunpack.c.l.b16 %v245
        %v374 = vunpack.c.l.b16 %v246
        %v375 = vunpack.c.l.b16 %v247
        %v376 = vunpack.c.l.b16 %v248
        %v377 = vunpack.c.l.b16 %v249
        %v378 = vunpack.c.l.b16 %v250
        %v379 = vunpack.c.l.b16 %v251
        %v380 = vunpack.c.l.b16 %v252
        %v381 = vunpack.c.l.b16 %v253
        %v382 = vunpack.c.l.b16 %v254
        %v383 = vunpack.c.l.b16 %v255
        %v384 = vunpack.c.l.b16 %v256
        %v385 = vunpack.c.l.b16 %v257
        %v386 = vunpack.c.l.b16 %v258
        %v387 = vunpack.c.l.b16 %v259
        %v388 = vunpack.c.l.b16 %v260
        %v389 = vunpack.c.l.b16 %v261
        %v390 = vunpack.c.l.b16 %v262
        %v391 = vunpack.c.l.b16 %v263
        %v392 = vunpack.c.l.b16 %v264
        %v393 = vunpack.c.l.b16 %v265
        %v394 = vunpack.c.l.b16 %v266
        %v395 = vunpack.c.l.b16 %v267
        %v396 = vpack.c.b16 %v333, %v332
        %v397 = vpack.c.b16 %v335, %v334
        %v398 = vpack.c.b16 %v337, %v336
        %v399 = vpack.c.b16 %v339, %v338
        %v400 = vpack.c.b16 %v341, %v340
        %v401 = vpack.c.b16 %v343, %v342
        %v402 = vpack.c.b16 %v345, %v344
        %v403 = vpack.c.b16 %v347, %v346
        %v404 = vpack.c.b16 %v349, %v348
        %v405 = vpack.c.b16 %v351, %v350
        %v406 = vpack.c.b16 %v353, %v352
        %v407 = vpack.c.b16 %v355, %v354
        %v408 = vpack.c.b16 %v357, %v356
        %v409 = vpack.c.b16 %v359, %v358
        %v410 = vpack.c.b16 %v361, %v360
        %v411 = vpack.c.b16 %v363, %v362
        %v412 = vpack.c.b16 %v365, %v364
        %v413 = vpack.c.b16 %v367, %v366
        %v414 = vpack.c.b16 %v369, %v368
        %v415 = vpack.c.b16 %v371, %v370
        %v416 = vpack.c.b16 %v373, %v372
        %v417 = vpack.c.b16 %v375, %v374
        %v418 = vpack.c.b16 %v377, %v376
        %v419 = vpack.c.b16 %v379, %v378
        %v420 = vpack.c.b16 %v381, %v380
        %v421 = vpack.c.b16 %v383, %v382
        %v422 = vpack.c.b16 %v385, %v384
        %v423 = vpack.c.b16 %v387, %v386
        %v424 = vpack.c.b16 %v389, %v388
        %v425 = vpack.c.b16 %v391, %v390
        %v426 = vpack.c.b16 %v393, %v392
        %v427 = vpack.c.b16 %v395, %v394
        %vm428 = vcmask 261120
        %v430 = vsel %vm428, %v203, 0
        %v433 = vsel %vm428, %v396, 0
        %v436 = vsel %vm428, %v397, 0
        %v439 = vsel %vm428, %v398, 0
        %v442 = vsel %vm428, %v399, 0
        %v445 = vsel %vm428, %v400, 0
        %v448 = vsel %vm428, %v401, 0
        %v451 = vsel %vm428, %v402, 0
        %v454 = vsel %vm428, %v403, 0
        %v457 = vsel %vm428, %v404, 0
        %v460 = vsel %vm428, %v405, 0
        %v463 = vsel %vm428, %v406, 0
        %v466 = vsel %vm428, %v407, 0
        %v469 = vsel %vm428, %v408, 0
        %v472 = vsel %vm428, %v409, 0
        %v475 = vsel %vm428, %v410, 0
        %v478 = vsel %vm428, %v411, 0
        %v481 = vsel %vm428, %v412, 0
        %v484 = vsel %vm428, %v413, 0
        %v487 = vsel %vm428, %v414, 0
        %v490 = vsel %vm428, %v415, 0
        %v493 = vsel %vm428, %v416, 0
        %v496 = vsel %vm428, %v417, 0
        %v499 = vsel %vm428, %v418, 0
        %v502 = vsel %vm428, %v419, 0
        %v505 = vsel %vm428, %v420, 0
        %v508 = vsel %vm428, %v421, 0
        %v511 = vsel %vm428, %v422, 0
        %v514 = vsel %vm428, %v423, 0
        %v517 = vsel %vm428, %v424, 0
        %v520 = vsel %vm428, %v425, 0
        %v523 = vsel %vm428, %v426, 0
        %v526 = vsel %vm428, %v427, 0
        %528 = vmatpush.bf16.xpose.msra.mxu0 %v454
        %529 = vmatpush.bf16.xpose.msra.mxu0 %v451
        %530 = vmatpush.bf16.xpose.msra.mxu0 %v448
        %531 = vmatpush.bf16.xpose.msra.mxu0 %v445
        %532 = vmatpush.bf16.xpose.msra.mxu0 %v442
        %533 = vmatpush.bf16.xpose.msra.mxu0 %v439
        %534 = vmatpush.bf16.xpose.msra.mxu0 %v436
        %535 = vmatpush.bf16.xpose.msra.mxu0 %v433
        %536 = vmatmul.bf16.gmra.mxu0 %v430
        %v537 = vpop.f32.mrf.mxu0
        %v538 = vadd.f32 0.0, %v537
        %v539 = vpop.f32.mrf.mxu0
        %540 = vdwg.mxu0
        %541 = vmatpush.bf16.xpose.msra.mxu0 %v478
        %542 = vmatpush.bf16.xpose.msra.mxu0 %v475
        %543 = vmatpush.bf16.xpose.msra.mxu0 %v472
        %544 = vmatpush.bf16.xpose.msra.mxu0 %v469
        %545 = vmatpush.bf16.xpose.msra.mxu0 %v466
        %546 = vmatpush.bf16.xpose.msra.mxu0 %v463
        %547 = vmatpush.bf16.xpose.msra.mxu0 %v460
        %548 = vmatpush.bf16.xpose.msra.mxu0 %v457
        %549 = vmatmul.bf16.gmra.mxu0 %v430
        %v550 = vpop.f32.mrf.mxu0
        %v551 = vadd.f32 0.0, %v550
        %v552 = vpop.f32.mrf.mxu0
        %553 = vdwg.mxu0
        %554 = vmatpush.bf16.xpose.msra.mxu0 %v502
        %555 = vmatpush.bf16.xpose.msra.mxu0 %v499
        %556 = vmatpush.bf16.xpose.msra.mxu0 %v496
        %557 = vmatpush.bf16.xpose.msra.mxu0 %v493
        %558 = vmatpush.bf16.xpose.msra.mxu0 %v490
        %559 = vmatpush.bf16.xpose.msra.mxu0 %v487
        %560 = vmatpush.bf16.xpose.msra.mxu0 %v484
        %561 = vmatpush.bf16.xpose.msra.mxu0 %v481
        %562 = vmatmul.bf16.gmra.mxu0 %v430
        %v563 = vpop.f32.mrf.mxu0
        %v564 = vadd.f32 0.0, %v563
        %v565 = vpop.f32.mrf.mxu0
        %566 = vdwg.mxu0
        %567 = vmatpush.bf16.xpose.msra.mxu0 %v526
        %568 = vmatpush.bf16.xpose.msra.mxu0 %v523
        %569 = vmatpush.bf16.xpose.msra.mxu0 %v520
        %570 = vmatpush.bf16.xpose.msra.mxu0 %v517
        %571 = vmatpush.bf16.xpose.msra.mxu0 %v514
        %572 = vmatpush.bf16.xpose.msra.mxu0 %v511
        %573 = vmatpush.bf16.xpose.msra.mxu0 %v508
        %574 = vmatpush.bf16.xpose.msra.mxu0 %v505
        %575 = vmatmul.bf16.gmra.mxu0 %v430
        %v576 = vpop.f32.mrf.mxu0
        %v577 = vadd.f32 0.0, %v576
        %v578 = vpop.f32.mrf.mxu0
        %579 = vdwg.mxu0
        %v580 = vlaneseq
        %v581 = vand.u32 %v580, 127
        %v582 = vadd.s32 %v581, 128
        %v583 = vadd.s32 %v581, 256
        %v584 = vadd.s32 %v581, 384
        %s585 = smul.u32 %s22, 512
        %v586 = vstv %s585
        %v587 = vadd.s32 %v581, %v586
        %v588 = vadd.s32 %v582, %v586
        %v589 = vadd.s32 %v583, %v586
        %v590 = vadd.s32 %v584, %v586
        %vm591 = vcmp.lt.s32.totalorder %v587, 2048
        %vm592 = vcmp.lt.s32.totalorder %v588, 2048
        %vm593 = vcmp.lt.s32.totalorder %v589, 2048
        %vm594 = vcmp.lt.s32.totalorder %v590, 2048
        %v595 = vsel %vm591, %v538, -inf
        %v596 = vsel %vm592, %v551, -inf
        %v597 = vsel %vm593, %v564, -inf
        %v598 = vsel %vm594, %v577, -inf
        %v599 = vmax.f32 %v595, %v596
        %v600 = vmax.f32 %v597, %v598
        %v601 = vmax.f32 %v599, %v600
        %602 = vmax.xlane.f32.xlu0 %v601
        %v603 = vpop.xlane.xlu0 %602
        %vm604 = vcmp.eq.f32.partialorder %v595, %v603
        %vm605 = vcmp.eq.f32.partialorder %v596, %v603
        %vm606 = vcmp.eq.f32.partialorder %v597, %v603
        %vm607 = vcmp.eq.f32.partialorder %v598, %v603
        %v608 = vsel %vm604, %v581, 512
        %v609 = vsel %vm605, %v582, 512
        %v610 = vsel %vm606, %v583, 512
        %v611 = vsel %vm607, %v584, 512
        %vm612 = vcmp.lt.s32.totalorder %v608, %v609
        %v613 = vsel %vm612, %v608, %v609
        %vm614 = vcmp.lt.s32.totalorder %v610, %v611
        %v615 = vsel %vm614, %v610, %v611
        %vm616 = vcmp.lt.s32.totalorder %v613, %v615
        %v617 = vsel %vm616, %v613, %v615
        %v618 = vand.u32 %v617, 65535
        %v619 = vshra.s32 %v617, 16
        %v620 = vcvt.s32.f32 %v618
        %v621 = vcvt.s32.f32 %v619
        %622 = vmin.xlane.f32.xlu0 %v621
        %v623 = vpop.xlane.xlu0 %622
        %vm624 = vcmp.eq.f32.partialorder %v621, %v623
        %v625 = vsel %vm624, %v620, inf
        %626 = vmin.xlane.f32.xlu0 %v625
        %v627 = vpop.xlane.xlu0 %626
        %v628 = vcvt.f32.s32 %v627
        %v629 = vcvt.f32.s32 %v623
        %v630 = vshll.u32 %v629, 16
        %v631 = vadd.s32 %v630, %v628
        %v632 = vadd.s32 %v631, %v586
        %vm633 = vcmp.eq.s32.totalorder %v581, %v631
        %vm634 = vcmp.eq.s32.totalorder %v582, %v631
        %vm635 = vcmp.eq.s32.totalorder %v583, %v631
        %vm636 = vcmp.eq.s32.totalorder %v584, %v631
        %v637 = vsel %vm633, -inf, %v595
        %v638 = vsel %vm634, -inf, %v596
        %v639 = vsel %vm635, -inf, %v597
        %v640 = vsel %vm636, -inf, %v598
        %v641 = vmax.f32 %v637, %v638
        %v642 = vmax.f32 %v639, %v640
        %v643 = vmax.f32 %v641, %v642
        %644 = vmax.xlane.f32.xlu0 %v643
        %v645 = vpop.xlane.xlu0 %644
        %vm646 = vcmp.eq.f32.partialorder %v637, %v645
        %vm647 = vcmp.eq.f32.partialorder %v638, %v645
        %vm648 = vcmp.eq.f32.partialorder %v639, %v645
        %vm649 = vcmp.eq.f32.partialorder %v640, %v645
        %v650 = vsel %vm646, %v581, 512
        %v651 = vsel %vm647, %v582, 512
        %v652 = vsel %vm648, %v583, 512
        %v653 = vsel %vm649, %v584, 512
        %vm654 = vcmp.lt.s32.totalorder %v650, %v651
        %v655 = vsel %vm654, %v650, %v651
        %vm656 = vcmp.lt.s32.totalorder %v652, %v653
        %v657 = vsel %vm656, %v652, %v653
        %vm658 = vcmp.lt.s32.totalorder %v655, %v657
        %v659 = vsel %vm658, %v655, %v657
        %v660 = vand.u32 %v659, 65535
        %v661 = vshra.s32 %v659, 16
        %v662 = vcvt.s32.f32 %v660
        %v663 = vcvt.s32.f32 %v661
        %664 = vmin.xlane.f32.xlu0 %v663
        %v665 = vpop.xlane.xlu0 %664
        %vm666 = vcmp.eq.f32.partialorder %v663, %v665
        %v667 = vsel %vm666, %v662, inf
        %668 = vmin.xlane.f32.xlu0 %v667
        %v669 = vpop.xlane.xlu0 %668
        %v670 = vcvt.f32.s32 %v669
        %v671 = vcvt.f32.s32 %v665
        %v672 = vshll.u32 %v671, 16
        %v673 = vadd.s32 %v672, %v670
        %v674 = vadd.s32 %v673, %v586
        %vm675 = vcmp.eq.s32.totalorder %v581, %v673
        %vm676 = vcmp.eq.s32.totalorder %v582, %v673
        %vm677 = vcmp.eq.s32.totalorder %v583, %v673
        %vm678 = vcmp.eq.s32.totalorder %v584, %v673
        %v679 = vsel %vm675, -inf, %v637
        %v680 = vsel %vm676, -inf, %v638
        %v681 = vsel %vm677, -inf, %v639
        %v682 = vsel %vm678, -inf, %v640
        %v683 = vmax.f32 %v679, %v680
        %v684 = vmax.f32 %v681, %v682
        %v685 = vmax.f32 %v683, %v684
        %686 = vmax.xlane.f32.xlu0 %v685
        %v687 = vpop.xlane.xlu0 %686
        %vm688 = vcmp.eq.f32.partialorder %v679, %v687
        %vm689 = vcmp.eq.f32.partialorder %v680, %v687
        %vm690 = vcmp.eq.f32.partialorder %v681, %v687
        %vm691 = vcmp.eq.f32.partialorder %v682, %v687
        %v692 = vsel %vm688, %v581, 512
        %v693 = vsel %vm689, %v582, 512
        %v694 = vsel %vm690, %v583, 512
        %v695 = vsel %vm691, %v584, 512
        %vm696 = vcmp.lt.s32.totalorder %v692, %v693
        %v697 = vsel %vm696, %v692, %v693
        %vm698 = vcmp.lt.s32.totalorder %v694, %v695
        %v699 = vsel %vm698, %v694, %v695
        %vm700 = vcmp.lt.s32.totalorder %v697, %v699
        %v701 = vsel %vm700, %v697, %v699
        %v702 = vand.u32 %v701, 65535
        %v703 = vshra.s32 %v701, 16
        %v704 = vcvt.s32.f32 %v702
        %v705 = vcvt.s32.f32 %v703
        %706 = vmin.xlane.f32.xlu0 %v705
        %v707 = vpop.xlane.xlu0 %706
        %vm708 = vcmp.eq.f32.partialorder %v705, %v707
        %v709 = vsel %vm708, %v704, inf
        %710 = vmin.xlane.f32.xlu0 %v709
        %v711 = vpop.xlane.xlu0 %710
        %v712 = vcvt.f32.s32 %v711
        %v713 = vcvt.f32.s32 %v707
        %v714 = vshll.u32 %v713, 16
        %v715 = vadd.s32 %v714, %v712
        %v716 = vadd.s32 %v715, %v586
        %vm717 = vcmp.eq.s32.totalorder %v581, %v715
        %vm718 = vcmp.eq.s32.totalorder %v582, %v715
        %vm719 = vcmp.eq.s32.totalorder %v583, %v715
        %vm720 = vcmp.eq.s32.totalorder %v584, %v715
        %v721 = vsel %vm717, -inf, %v679
        %v722 = vsel %vm718, -inf, %v680
        %v723 = vsel %vm719, -inf, %v681
        %v724 = vsel %vm720, -inf, %v682
        %v725 = vmax.f32 %v721, %v722
        %v726 = vmax.f32 %v723, %v724
        %v727 = vmax.f32 %v725, %v726
        %728 = vmax.xlane.f32.xlu0 %v727
        %v729 = vpop.xlane.xlu0 %728
        %vm730 = vcmp.eq.f32.partialorder %v721, %v729
        %vm731 = vcmp.eq.f32.partialorder %v722, %v729
        %vm732 = vcmp.eq.f32.partialorder %v723, %v729
        %vm733 = vcmp.eq.f32.partialorder %v724, %v729
        %v734 = vsel %vm730, %v581, 512
        %v735 = vsel %vm731, %v582, 512
        %v736 = vsel %vm732, %v583, 512
        %v737 = vsel %vm733, %v584, 512
        %vm738 = vcmp.lt.s32.totalorder %v734, %v735
        %v739 = vsel %vm738, %v734, %v735
        %vm740 = vcmp.lt.s32.totalorder %v736, %v737
        %v741 = vsel %vm740, %v736, %v737
        %vm742 = vcmp.lt.s32.totalorder %v739, %v741
        %v743 = vsel %vm742, %v739, %v741
        %v744 = vand.u32 %v743, 65535
        %v745 = vshra.s32 %v743, 16
        %v746 = vcvt.s32.f32 %v744
        %v747 = vcvt.s32.f32 %v745
        %748 = vmin.xlane.f32.xlu0 %v747
        %v749 = vpop.xlane.xlu0 %748
        %vm750 = vcmp.eq.f32.partialorder %v747, %v749
        %v751 = vsel %vm750, %v746, inf
        %752 = vmin.xlane.f32.xlu0 %v751
        %v753 = vpop.xlane.xlu0 %752
        %v754 = vcvt.f32.s32 %v753
        %v755 = vcvt.f32.s32 %v749
        %v756 = vshll.u32 %v755, 16
        %v757 = vadd.s32 %v756, %v754
        %v758 = vadd.s32 %v757, %v586
        %vm759 = vcmp.eq.s32.totalorder %v581, %v757
        %vm760 = vcmp.eq.s32.totalorder %v582, %v757
        %vm761 = vcmp.eq.s32.totalorder %v583, %v757
        %vm762 = vcmp.eq.s32.totalorder %v584, %v757
        %v763 = vsel %vm759, -inf, %v721
        %v764 = vsel %vm760, -inf, %v722
        %v765 = vsel %vm761, -inf, %v723
        %v766 = vsel %vm762, -inf, %v724
        %v767 = vmax.f32 %v763, %v764
        %v768 = vmax.f32 %v765, %v766
        %v769 = vmax.f32 %v767, %v768
        %770 = vmax.xlane.f32.xlu0 %v769
        %v771 = vpop.xlane.xlu0 %770
        %vm772 = vcmp.eq.f32.partialorder %v763, %v771
        %vm773 = vcmp.eq.f32.partialorder %v764, %v771
        %vm774 = vcmp.eq.f32.partialorder %v765, %v771
        %vm775 = vcmp.eq.f32.partialorder %v766, %v771
        %v776 = vsel %vm772, %v581, 512
        %v777 = vsel %vm773, %v582, 512
        %v778 = vsel %vm774, %v583, 512
        %v779 = vsel %vm775, %v584, 512
        %vm780 = vcmp.lt.s32.totalorder %v776, %v777
        %v781 = vsel %vm780, %v776, %v777
        %vm782 = vcmp.lt.s32.totalorder %v778, %v779
        %v783 = vsel %vm782, %v778, %v779
        %vm784 = vcmp.lt.s32.totalorder %v781, %v783
        %v785 = vsel %vm784, %v781, %v783
        %v786 = vand.u32 %v785, 65535
        %v787 = vshra.s32 %v785, 16
        %v788 = vcvt.s32.f32 %v786
        %v789 = vcvt.s32.f32 %v787
        %790 = vmin.xlane.f32.xlu0 %v789
        %v791 = vpop.xlane.xlu0 %790
        %vm792 = vcmp.eq.f32.partialorder %v789, %v791
        %v793 = vsel %vm792, %v788, inf
        %794 = vmin.xlane.f32.xlu0 %v793
        %v795 = vpop.xlane.xlu0 %794
        %v796 = vcvt.f32.s32 %v795
        %v797 = vcvt.f32.s32 %v791
        %v798 = vshll.u32 %v797, 16
        %v799 = vadd.s32 %v798, %v796
        %v800 = vadd.s32 %v799, %v586
        %vm801 = vcmask 7168
        %v802 = vsel %vm801, %v603, %v645
        %vm803 = vcmask 15360
        %v804 = vsel %vm803, %v802, %v687
        %vm805 = vcmask 23552
        %v806 = vsel %vm805, %v804, %v729
        %vm807 = vcmask 31744
        %v808 = vsel %vm807, %v806, %v771
        %v809 = vsel %vm801, %v632, %v674
        %v810 = vsel %vm803, %v809, %v716
        %v811 = vsel %vm805, %v810, %v758
        %v812 = vsel %vm807, %v811, %v800
        %v813 = vld [vmem:[#allocation2] sm:$0xff]
        %v814 = vld [vmem:[#allocation4] sm:$0xff]
        %816 = vrot.lane.b32.xlu0 %v808, 5
        %v817 = vpop.permute.xlu0 %816
        %vm819 = vcmask 39936
        %v820 = vsel %vm819, %v813, %v817
        %821 = vrot.lane.b32.xlu0 %v812, 5
        %v822 = vpop.permute.xlu0 %821
        %v823 = vsel %vm819, %v814, %v822
        %vm824 = vcmask 80896
        %v825 = vsel %vm824, %v820, -inf
        %826 = vmax.xlane.f32.xlu0 %v825
        %v827 = vpop.xlane.xlu0 %826
        %vm828 = vcmp.eq.f32.partialorder %v820, %v827
        %v829 = vsel %vm828, %v581, 10
        %v830 = vsel %vm824, %v829, 2147483647
        %v831 = vand.u32 %v830, 65535
        %v832 = vshra.s32 %v830, 16
        %v833 = vcvt.s32.f32 %v831
        %v834 = vcvt.s32.f32 %v832
        %835 = vmin.xlane.f32.xlu0 %v834
        %v836 = vpop.xlane.xlu0 %835
        %vm837 = vcmp.eq.f32.partialorder %v834, %v836
        %v838 = vsel %vm837, %v833, inf
        %839 = vmin.xlane.f32.xlu0 %v838
        %v840 = vpop.xlane.xlu0 %839
        %v841 = vcvt.f32.s32 %v840
        %v842 = vcvt.f32.s32 %v836
        %v843 = vshll.u32 %v842, 16
        %v844 = vadd.s32 %v843, %v841
        %vm845 = vcmp.eq.s32.totalorder %v581, %v844
        %v846 = vsel %vm845, %v823, 4294967295
        %v847 = vsel %vm824, %v846, 2147483648
        %v848 = vand.u32 %v847, 65535
        %v849 = vshra.s32 %v847, 16
        %v850 = vcvt.s32.f32 %v848
        %v851 = vcvt.s32.f32 %v849
        %852 = vmax.xlane.f32.xlu0 %v851
        %v853 = vpop.xlane.xlu0 %852
        %vm854 = vcmp.eq.f32.partialorder %v851, %v853
        %v855 = vsel %vm854, %v850, -inf
        %856 = vmax.xlane.f32.xlu0 %v855
        %v857 = vpop.xlane.xlu0 %856
        %v858 = vcvt.f32.s32 %v857
        %v859 = vcvt.f32.s32 %v853
        %v860 = vshll.u32 %v859, 16
        %v861 = vadd.s32 %v860, %v858
        %v862 = vsel %vm845, -inf, %v820
        %v863 = vsel %vm824, %v862, -inf
        %864 = vmax.xlane.f32.xlu0 %v863
        %v865 = vpop.xlane.xlu0 %864
        %vm866 = vcmp.eq.f32.partialorder %v862, %v865
        %v867 = vsel %vm866, %v581, 10
        %v868 = vsel %vm824, %v867, 2147483647
        %v869 = vand.u32 %v868, 65535
        %v870 = vshra.s32 %v868, 16
        %v871 = vcvt.s32.f32 %v869
        %v872 = vcvt.s32.f32 %v870
        %873 = vmin.xlane.f32.xlu0 %v872
        %v874 = vpop.xlane.xlu0 %873
        %vm875 = vcmp.eq.f32.partialorder %v872, %v874
        %v876 = vsel %vm875, %v871, inf
        %877 = vmin.xlane.f32.xlu0 %v876
        %v878 = vpop.xlane.xlu0 %877
        %v879 = vcvt.f32.s32 %v878
        %v880 = vcvt.f32.s32 %v874
        %v881 = vshll.u32 %v880, 16
        %v882 = vadd.s32 %v881, %v879
        %vm883 = vcmp.eq.s32.totalorder %v581, %v882
        %v884 = vsel %vm883, %v823, 4294967295
        %v885 = vsel %vm824, %v884, 2147483648
        %v886 = vand.u32 %v885, 65535
        %v887 = vshra.s32 %v885, 16
        %v888 = vcvt.s32.f32 %v886
        %v889 = vcvt.s32.f32 %v887
        %890 = vmax.xlane.f32.xlu0 %v889
        %v891 = vpop.xlane.xlu0 %890
        %vm892 = vcmp.eq.f32.partialorder %v889, %v891
        %v893 = vsel %vm892, %v888, -inf
        %894 = vmax.xlane.f32.xlu0 %v893
        %v895 = vpop.xlane.xlu0 %894
        %v896 = vcvt.f32.s32 %v895
        %v897 = vcvt.f32.s32 %v891
        %v898 = vshll.u32 %v897, 16
        %v899 = vadd.s32 %v898, %v896
        %v900 = vsel %vm883, -inf, %v862
        %v901 = vsel %vm824, %v900, -inf
        %902 = vmax.xlane.f32.xlu0 %v901
        %v903 = vpop.xlane.xlu0 %902
        %vm904 = vcmp.eq.f32.partialorder %v900, %v903
        %v905 = vsel %vm904, %v581, 10
        %v906 = vsel %vm824, %v905, 2147483647
        %v907 = vand.u32 %v906, 65535
        %v908 = vshra.s32 %v906, 16
        %v909 = vcvt.s32.f32 %v907
        %v910 = vcvt.s32.f32 %v908
        %911 = vmin.xlane.f32.xlu0 %v910
        %v912 = vpop.xlane.xlu0 %911
        %vm913 = vcmp.eq.f32.partialorder %v910, %v912
        %v914 = vsel %vm913, %v909, inf
        %915 = vmin.xlane.f32.xlu0 %v914
        %v916 = vpop.xlane.xlu0 %915
        %v917 = vcvt.f32.s32 %v916
        %v918 = vcvt.f32.s32 %v912
        %v919 = vshll.u32 %v918, 16
        %v920 = vadd.s32 %v919, %v917
        %vm921 = vcmp.eq.s32.totalorder %v581, %v920
        %v922 = vsel %vm921, %v823, 4294967295
        %v923 = vsel %vm824, %v922, 2147483648
        %v924 = vand.u32 %v923, 65535
        %v925 = vshra.s32 %v923, 16
        %v926 = vcvt.s32.f32 %v924
        %v927 = vcvt.s32.f32 %v925
        %928 = vmax.xlane.f32.xlu0 %v927
        %v929 = vpop.xlane.xlu0 %928
        %vm930 = vcmp.eq.f32.partialorder %v927, %v929
        %v931 = vsel %vm930, %v926, -inf
        %932 = vmax.xlane.f32.xlu0 %v931
        %v933 = vpop.xlane.xlu0 %932
        %v934 = vcvt.f32.s32 %v933
        %v935 = vcvt.f32.s32 %v929
        %v936 = vshll.u32 %v935, 16
        %v937 = vadd.s32 %v936, %v934
        %v938 = vsel %vm921, -inf, %v900
        %v939 = vsel %vm824, %v938, -inf
        %940 = vmax.xlane.f32.xlu0 %v939
        %v941 = vpop.xlane.xlu0 %940
        %vm942 = vcmp.eq.f32.partialorder %v938, %v941
        %v943 = vsel %vm942, %v581, 10
        %v944 = vsel %vm824, %v943, 2147483647
        %v945 = vand.u32 %v944, 65535
        %v946 = vshra.s32 %v944, 16
        %v947 = vcvt.s32.f32 %v945
        %v948 = vcvt.s32.f32 %v946
        %949 = vmin.xlane.f32.xlu0 %v948
        %v950 = vpop.xlane.xlu0 %949
        %vm951 = vcmp.eq.f32.partialorder %v948, %v950
        %v952 = vsel %vm951, %v947, inf
        %953 = vmin.xlane.f32.xlu0 %v952
        %v954 = vpop.xlane.xlu0 %953
        %v955 = vcvt.f32.s32 %v954
        %v956 = vcvt.f32.s32 %v950
        %v957 = vshll.u32 %v956, 16
        %v958 = vadd.s32 %v957, %v955
        %vm959 = vcmp.eq.s32.totalorder %v581, %v958
        %v960 = vsel %vm959, %v823, 4294967295
        %v961 = vsel %vm824, %v960, 2147483648
        %v962 = vand.u32 %v961, 65535
        %v963 = vshra.s32 %v961, 16
        %v964 = vcvt.s32.f32 %v962
        %v965 = vcvt.s32.f32 %v963
        %966 = vmax.xlane.f32.xlu0 %v965
        %v967 = vpop.xlane.xlu0 %966
        %vm968 = vcmp.eq.f32.partialorder %v965, %v967
        %v969 = vsel %vm968, %v964, -inf
        %970 = vmax.xlane.f32.xlu0 %v969
        %v971 = vpop.xlane.xlu0 %970
        %v972 = vcvt.f32.s32 %v971
        %v973 = vcvt.f32.s32 %v967
        %v974 = vshll.u32 %v973, 16
        %v975 = vadd.s32 %v974, %v972
        %v976 = vsel %vm959, -inf, %v938
        %v977 = vsel %vm824, %v976, -inf
        %978 = vmax.xlane.f32.xlu0 %v977
        %v979 = vpop.xlane.xlu0 %978
        %vm980 = vcmp.eq.f32.partialorder %v976, %v979
        %v981 = vsel %vm980, %v581, 10
        %v982 = vsel %vm824, %v981, 2147483647
        %v983 = vand.u32 %v982, 65535
        %v984 = vshra.s32 %v982, 16
        %v985 = vcvt.s32.f32 %v983
        %v986 = vcvt.s32.f32 %v984
        %987 = vmin.xlane.f32.xlu0 %v986
        %v988 = vpop.xlane.xlu0 %987
        %vm989 = vcmp.eq.f32.partialorder %v986, %v988
        %v990 = vsel %vm989, %v985, inf
        %991 = vmin.xlane.f32.xlu0 %v990
        %v992 = vpop.xlane.xlu0 %991
        %v993 = vcvt.f32.s32 %v992
        %v994 = vcvt.f32.s32 %v988
        %v995 = vshll.u32 %v994, 16
        %v996 = vadd.s32 %v995, %v993
        %vm997 = vcmp.eq.s32.totalorder %v581, %v996
        %v998 = vsel %vm997, %v823, 4294967295
        %v999 = vsel %vm824, %v998, 2147483648
        %v1000 = vand.u32 %v999, 65535
        %v1001 = vshra.s32 %v999, 16
        %v1002 = vcvt.s32.f32 %v1000
        %v1003 = vcvt.s32.f32 %v1001
        %1004 = vmax.xlane.f32.xlu0 %v1003
        %v1005 = vpop.xlane.xlu0 %1004
        %vm1006 = vcmp.eq.f32.partialorder %v1003, %v1005
        %v1007 = vsel %vm1006, %v1002, -inf
        %1008 = vmax.xlane.f32.xlu0 %v1007
        %v1009 = vpop.xlane.xlu0 %1008
        %v1010 = vcvt.f32.s32 %v1009
        %v1011 = vcvt.f32.s32 %v1005
        %v1012 = vshll.u32 %v1011, 16
        %v1013 = vadd.s32 %v1012, %v1010
        %v1014 = vsel %vm801, %v827, %v865
        %v1015 = vsel %vm803, %v1014, %v903
        %v1016 = vsel %vm805, %v1015, %v941
        %v1017 = vsel %vm807, %v1016, %v979
        %v1018 = vsel %vm801, %v861, %v899
        %v1019 = vsel %vm803, %v1018, %v937
        %v1020 = vsel %vm805, %v1019, %v975
        %v1021 = vsel %vm807, %v1020, %v1013
        %v1022 = vsel %vm819, %v1017, -inf
        %1023 = vst [vmem:[#allocation2] sm:$0xff] %v1022
        %v1024 = vsel %vm819, %v1021, 0
        %1025 = vst [vmem:[#allocation4] sm:$0xff] %v1024
        // Predicated region
        $region33: #{tpu_custom_call.1} parent=27 // pred_check
          %p1026 = pneg %p99
        $region34: #{tpu_custom_call.1} parent=27 // pred_check_branch
          %1028 = sbr.rel (%p1026) target = $region36
        $region35: #{tpu_custom_call.1} parent=27 // pred_region
          %1030 = vsyncadd [#allocation3], 0
          %s1031 = smul.addr %s21, 8
          %s1032 = scalar_lea.hbm %s2, %s1031
          %s1034 = sshll.u32 [#allocation2], 4
          %s1035 = int_to_ptr.vmem [resolvable:$true] %s1034
          %s1036 = sshll.u32 %s1032, 4
          %s1037 = int_to_ptr.hbm [resolvable:$true] %s1036
          %1039 = dma.vmem_to_hbm [thread:$0]  %s1035, 128, %s1037, [#allocation3]
        $region36: #{tpu_custom_call.1} parent=27 // pred_fallthru
          _
        // Predicated region
        $region37: #{tpu_custom_call.1} parent=27 // pred_check
          %p1040 = pneg %p125
        $region38: #{tpu_custom_call.1} parent=27 // pred_check_branch
          %1042 = sbr.rel (%p1040) target = $region40
        $region39: #{tpu_custom_call.1} parent=27 // pred_region
          %1044 = vsyncadd [#allocation5], 0
          %s1045 = smul.addr %s21, 8
          %s1046 = scalar_lea.hbm %s3, %s1045
          %s1048 = sshll.u32 [#allocation4], 4
          %s1049 = int_to_ptr.vmem [resolvable:$true] %s1048
          %s1050 = sshll.u32 %s1046, 4
          %s1051 = int_to_ptr.hbm [resolvable:$true] %s1050
          %1053 = dma.vmem_to_hbm [thread:$0]  %s1049, 128, %s1051, [#allocation5]
        $region40: #{tpu_custom_call.1} parent=27 // pred_fallthru
          _
        // Predicated region
        $region41: #{tpu_custom_call.1} parent=27 // pred_check
          %p1054 = pneg %p99
        $region42: #{tpu_custom_call.1} parent=27 // pred_check_branch
          %1056 = sbr.rel (%p1054) target = $region44
        $region43: #{tpu_custom_call.1} parent=27 // pred_region
          %1058 = dma.done [#allocation3], 128
        $region44: #{tpu_custom_call.1} parent=27 // pred_fallthru
          _
        // Predicated region
        $region45: #{tpu_custom_call.1} parent=27 // pred_check
          %p1059 = pneg %p125
        $region46: #{tpu_custom_call.1} parent=27 // pred_check_branch
          %1061 = sbr.rel (%p1059) target = $region48
        $region47: #{tpu_custom_call.1} parent=27 // pred_region
          %1063 = dma.done [#allocation5], 128
        $region48: #{tpu_custom_call.1} parent=27 // pred_fallthru
          _
      $region28: #{tpu_custom_call.1} parent=5 // pred_fallthru
        _
      %p1064 = scmp.le.s32.totalorder 2, %s12
      // Predicated region
      $region49: #{tpu_custom_call.1} parent=5 // pred_check
        %p1065 = pneg %p1064
      $region50: #{tpu_custom_call.1} parent=5 // pred_check_branch
        %1067 = sbr.rel (%p1065) target = $region52
      $region51: #{tpu_custom_call.1} parent=5 // pred_region
        %s1068 = ssub.s32 %s12, 2
      $region52: #{tpu_custom_call.1} parent=5 // pred_fallthru
        _
    $region6: #{tpu_custom_call.1} parent=1 // loop_footer
      %s16 = sadd.s32 1, %s12
    $region7: #{tpu_custom_call.1} parent=1 // loop_footer_branch
      %11 = sbr.rel target = $region3
    $region8: #{tpu_custom_call.1} parent=1 // loop_exit
      _
    %1069 = vsyncpa [#allocation3], 1
    %s1070 = scalar_lea.sflag [#allocation3], 1
    %1071 = vsyncpa %s1070, 1
    %1072 = vsyncpa [#allocation5], 1

</llo_original>
